<compile_context>
chip_gen: v5e
topology: v5e:2x2
jax: 0.10.0
libtpu: 0.0.40
codegen_flags: <defaults>
</compile_context>

<pallas_src>
import math

import jax
import jax.numpy as jnp
from jax import lax
from jax.experimental import pallas as pl
from jax.experimental.pallas import tpu as pltpu

_HALF_LOG_2PI = 0.5 * math.log(2.0 * 3.141592653)
_LANE = 128
_TWO_MIB = 2 * 1024 * 1024


def _round_up(x, m):
    return -(-x // m) * m


def _make_kernel(group_size, tile_g, num_groups, ragged):
    inv_s = 1.0 / float(group_size)

    def kernel(pv_ref, tgt_ref, out_ref):
        # pv_ref: (2, S, tile_g) = [mean; variance], tgt_ref: (S, tile_g),
        # out_ref: (1, tile_g) per-group mean loss (lane-dense).
        mean = pv_ref[0]
        tgt = tgt_ref[...]
        var = pv_ref[1]

        if ragged:
            # Tail block: lanes beyond the last real group hold undefined data.
            # Those lanes are dropped by the partial output store, but mask
            # them before any transcendental so the math stays finite.
            gid = (pl.program_id(0) * tile_g
                   + lax.broadcasted_iota(jnp.int32, mean.shape, 1))
            valid = gid < num_groups
            mean = jnp.where(valid, mean, 0.0)
            tgt = jnp.where(valid, tgt, 0.0)
            var = jnp.where(valid, var, 1.0)

        def log_softmax(x):  # per-group (per-lane) softmax along sublane axis
            m = jnp.max(x, axis=0, keepdims=True)
            lse = jnp.log(jnp.sum(jnp.exp(x - m), axis=0, keepdims=True)) + m
            return x - lse

        # Target / penalty contribution first (releases tgt, log_t early).
        log_t = log_softmax(tgt)
        acc = jnp.abs(mean - tgt) - log_t
        diff = log_t - log_softmax(mean)

        # 1/var: EUP approx reciprocal + one Newton step on the VPU.
        inv_var = pl.reciprocal(var, approx=True)
        inv_var = inv_var * (2.0 - var * inv_var)

        acc = acc + (0.5 * diff * diff * inv_var
                     + 0.5 * jnp.log(var) + _HALF_LOG_2PI)

        # Single reduction over the within-group (sublane) axis.
        out_ref[...] = (jnp.sum(acc, axis=0, keepdims=True) * inv_s
                        ).astype(out_ref.dtype)

    return kernel


def evidential_ranking_loss(possibilities, scope, targets,
                            max_coeff=None, epoch=None, epochs=None, gpu=None):
    """possibilities: (N, 2) f32, scope: list of equal group sizes, targets: (N,).
    Returns the averaged loss with shape (1,) float32."""
    group_size = int(scope[0])
    assert all(int(s) == group_size for s in scope), "equal group sizes assumed"
    # TODO(synk): ragged `scope` (unequal group sizes) is not supported.
    G = len(scope)
    S = group_size
    n = G * S
    assert possibilities.shape[0] == n and targets.shape[0] == n

    # Lane-dense layout: groups on the lane (last) axis, within-group axis on
    # sublanes.  One reshape+transpose per input, no padding pass.
    # TODO(synk): produce this (2, S, G)/(S, G) layout upstream to avoid the
    #             transpose's extra HBM pass entirely.
    pv = jnp.transpose(
        possibilities.astype(jnp.float32).reshape(G, S, 2), (2, 1, 0))     # (2, S, G)
    tg = jnp.transpose(targets.astype(jnp.float32).reshape(G, S), (1, 0))  # (S, G)

    # Generation-aware VMEM budget: 128 MiB physical on v5e/v6e, 64 MiB per
    # TensorCore on v7x.
    try:
        vmem_cap = int(getattr(pltpu.get_tpu_info(), "vmem_capacity_bytes", 0) or 0)
    except Exception:
        vmem_cap = 0
    if vmem_cap >= 100 * 1024 * 1024:            # v5e / v6e
        budget, vmem_limit = 24 * 1024 * 1024, 64 * 1024 * 1024
    else:                                        # v7x (or unknown -> conservative)
        budget, vmem_limit = 16 * 1024 * 1024, 48 * 1024 * 1024

    bytes_per_lane = 3 * S * 4                   # mean + var + tgt columns, f32
    # TODO(synk): tile the S axis (online softmax) for very large group sizes.
    assert 2 * bytes_per_lane * _LANE <= vmem_limit, (
        "group_size too large for single-S-block kernel")

    # tile_g: as large as the double-buffered budget allows; if everything fits
    # in one block but is big enough, split into 2 blocks so both v7x
    # TensorCores get work (each block must still move >= ~2 MiB of input).
    tile_cap = max(_LANE, (budget // (2 * bytes_per_lane)) // _LANE * _LANE)
    min_tile_2mb = _round_up(max(1, -(-_TWO_MIB // bytes_per_lane)), _LANE)
    g_ru = _round_up(G, _LANE)
    if g_ru > tile_cap:
        tile_g = tile_cap
    elif g_ru >= 2 * max(min_tile_2mb, _LANE):
        tile_g = _round_up(-(-g_ru // 2), _LANE)
    else:
        tile_g = G                               # single full block, no masking
    num_blocks = -(-G // tile_g)
    ragged = (G % tile_g) != 0

    kernel = _make_kernel(S, tile_g, G, ragged)
    per_group = pl.pallas_call(
        kernel,
        out_shape=jax.ShapeDtypeStruct((1, G), jnp.float32),
        grid=(num_blocks,),
        in_specs=[pl.BlockSpec((2, S, tile_g), lambda i: (0, 0, i)),
                  pl.BlockSpec((S, tile_g), lambda i: (0, i))],
        out_specs=pl.BlockSpec((1, tile_g), lambda i: (0, i)),
        compiler_params=pltpu.CompilerParams(
            dimension_semantics=("parallel",),
            vmem_limit_bytes=vmem_limit),
    )(pv, tg)

    # Tiny final reduction over real groups stays in XLA (keeps the grid axis
    # "parallel" for v7x TensorCore sharding).
    loss = jnp.sum(per_group) / G
    return loss.reshape(1)


def _reference_loss(possibilities, scope, targets):
    """Pure-JAX reference mirroring the PyTorch forward, for a sanity check."""
    losses = jnp.zeros((1,), jnp.float32)
    start = 0
    for s in scope:
        item = possibilities[start:start + s]
        batch_targets = targets[start:start + s]
        start += s
        norm_mean = item[:, 0]
        norm_variance = item[:, 1]
        pred_possibility = jax.nn.softmax(norm_mean, axis=0)
        targets_possibility = jax.nn.softmax(batch_targets, axis=0)
        uncertainty_loss = (0.5 * (jnp.log(targets_possibility)
                                   - jnp.log(pred_possibility)) ** 2
                            / norm_variance
                            + 0.5 * jnp.log(2 * 3.141592653 * norm_variance))
        penalty = jnp.abs(norm_mean - batch_targets)
        loss = jnp.mean(-jnp.log(targets_possibility) + uncertainty_loss + penalty)
        losses = losses + loss
    return losses / len(scope)


if __name__ == "__main__":
    key = jax.random.PRNGKey(0)
    k_mean, k_var, k_tgt = jax.random.split(key, 3)

    num_groups, group_size = 4, 8
    n = num_groups * group_size
    scope = [group_size] * num_groups

    norm_mean = jax.random.normal(k_mean, (n,), dtype=jnp.float32)
    # variance must be positive (module expects a sigmoid/positive head upstream)
    norm_variance = jax.random.uniform(k_var, (n,), dtype=jnp.float32,
                                       minval=0.1, maxval=1.0)
    possibilities = jnp.stack([norm_mean, norm_variance], axis=1)  # (N, 2)
    targets = jax.random.normal(k_tgt, (n,), dtype=jnp.float32)

    out = jax.block_until_ready(
        evidential_ranking_loss(possibilities, scope, targets,
                                max_coeff=1.0, epoch=0, epochs=10, gpu=None))
    ref = jax.block_until_ready(_reference_loss(possibilities, scope, targets))

    assert out.shape == (1,)
    assert jnp.allclose(out, ref, rtol=1e-5, atol=1e-5), (out, ref)

    print("KERNEL_OK")
</pallas_src>

<mosaic_0001>
module attributes {stable_mosaic.version = 11 : i64} {
  func.func @kernel(%arg0: i32, %arg1: memref<2x8x4xf32, #tpu.memory_space<vmem>>, %arg2: memref<8x4xf32, #tpu.memory_space<vmem>>, %arg3: memref<1x4xf32, #tpu.memory_space<vmem>>) attributes {dimension_semantics = [#tpu.dimension_semantics<parallel>], iteration_bounds = array<i64: 1>, scalar_prefetch = 0 : i64, scratch_operands = 0 : i64, tpu.core_type = #tpu.core_type<tc>, window_params = [{transform_indices = @transform_0, window_bounds = array<i64: 2, 8, 4>}, {transform_indices = @transform_1, window_bounds = array<i64: 8, 4>}, {transform_indices = @transform_2, window_bounds = array<i64: 1, 4>}]} {
    %c0 = arith.constant 0 : index
    %c0_0 = arith.constant 0 : index
    %c0_1 = arith.constant 0 : index
    %0 = vector.load %arg1[%c0, %c0_0, %c0_1] : memref<2x8x4xf32, #tpu.memory_space<vmem>>, vector<1x8x4xf32>
    %1 = vector.shape_cast %0 : vector<1x8x4xf32> to vector<8x4xf32>
    %c0_2 = arith.constant 0 : index
    %c0_3 = arith.constant 0 : index
    %2 = vector.load %arg2[%c0_2, %c0_3] : memref<8x4xf32, #tpu.memory_space<vmem>>, vector<8x4xf32>
    %c1 = arith.constant 1 : index
    %c0_4 = arith.constant 0 : index
    %c0_5 = arith.constant 0 : index
    %3 = vector.load %arg1[%c1, %c0_4, %c0_5] : memref<2x8x4xf32, #tpu.memory_space<vmem>>, vector<1x8x4xf32>
    %4 = vector.shape_cast %3 : vector<1x8x4xf32> to vector<8x4xf32>
    %cst = arith.constant dense<0xFF800000> : vector<4xf32>
    %5 = vector.multi_reduction <maximumf>, %2, %cst [0] : vector<8x4xf32> to vector<4xf32>
    %6 = vector.shape_cast %5 : vector<4xf32> to vector<1x4xf32>
    %7 = vector.broadcast %6 : vector<1x4xf32> to vector<8x4xf32>
    %8 = arith.subf %2, %7 : vector<8x4xf32>
    %9 = math.exp %8 : vector<8x4xf32>
    %cst_6 = arith.constant dense<0.000000e+00> : vector<4xf32>
    %10 = vector.multi_reduction <add>, %9, %cst_6 [0] : vector<8x4xf32> to vector<4xf32>
    %11 = vector.shape_cast %10 : vector<4xf32> to vector<1x4xf32>
    %12 = math.log %11 : vector<1x4xf32>
    %13 = arith.addf %12, %6 : vector<1x4xf32>
    %14 = vector.broadcast %13 : vector<1x4xf32> to vector<8x4xf32>
    %15 = arith.subf %2, %14 : vector<8x4xf32>
    %16 = arith.subf %1, %2 : vector<8x4xf32>
    %17 = math.absf %16 : vector<8x4xf32>
    %18 = arith.subf %17, %15 : vector<8x4xf32>
    %cst_7 = arith.constant dense<0xFF800000> : vector<4xf32>
    %19 = vector.multi_reduction <maximumf>, %1, %cst_7 [0] : vector<8x4xf32> to vector<4xf32>
    %20 = vector.shape_cast %19 : vector<4xf32> to vector<1x4xf32>
    %21 = vector.broadcast %20 : vector<1x4xf32> to vector<8x4xf32>
    %22 = arith.subf %1, %21 : vector<8x4xf32>
    %23 = math.exp %22 : vector<8x4xf32>
    %cst_8 = arith.constant dense<0.000000e+00> : vector<4xf32>
    %24 = vector.multi_reduction <add>, %23, %cst_8 [0] : vector<8x4xf32> to vector<4xf32>
    %25 = vector.shape_cast %24 : vector<4xf32> to vector<1x4xf32>
    %26 = math.log %25 : vector<1x4xf32>
    %27 = arith.addf %26, %20 : vector<1x4xf32>
    %28 = vector.broadcast %27 : vector<1x4xf32> to vector<8x4xf32>
    %29 = arith.subf %1, %28 : vector<8x4xf32>
    %30 = arith.subf %15, %29 : vector<8x4xf32>
    %31 = tpu.reciprocal %4 {approx = true} : vector<8x4xf32> -> vector<8x4xf32>
    %32 = arith.mulf %4, %31 : vector<8x4xf32>
    %cst_9 = arith.constant 2.000000e+00 : f32
    %33 = vector.broadcast %cst_9 : f32 to vector<8x4xf32>
    %34 = arith.subf %33, %32 : vector<8x4xf32>
    %35 = arith.mulf %31, %34 : vector<8x4xf32>
    %cst_10 = arith.constant 5.000000e-01 : f32
    %36 = vector.broadcast %cst_10 : f32 to vector<8x4xf32>
    %37 = arith.mulf %36, %30 : vector<8x4xf32>
    %38 = arith.mulf %37, %30 : vector<8x4xf32>
    %39 = arith.mulf %38, %35 : vector<8x4xf32>
    %40 = math.log %4 : vector<8x4xf32>
    %cst_11 = arith.constant 5.000000e-01 : f32
    %41 = vector.broadcast %cst_11 : f32 to vector<8x4xf32>
    %42 = arith.mulf %41, %40 : vector<8x4xf32>
    %43 = arith.addf %39, %42 : vector<8x4xf32>
    %cst_12 = arith.constant 0.918938517 : f32
    %44 = vector.broadcast %cst_12 : f32 to vector<8x4xf32>
    %45 = arith.addf %43, %44 : vector<8x4xf32>
    %46 = arith.addf %18, %45 : vector<8x4xf32>
    %cst_13 = arith.constant dense<0.000000e+00> : vector<4xf32>
    %47 = vector.multi_reduction <add>, %46, %cst_13 [0] : vector<8x4xf32> to vector<4xf32>
    %48 = vector.shape_cast %47 : vector<4xf32> to vector<1x4xf32>
    %cst_14 = arith.constant 1.250000e-01 : f32
    %49 = vector.broadcast %cst_14 : f32 to vector<1x4xf32>
    %50 = arith.mulf %48, %49 : vector<1x4xf32>
    %c0_15 = arith.constant 0 : index
    %c0_16 = arith.constant 0 : index
    %51 = vector.load %arg3[%c0_15, %c0_16] : memref<1x4xf32, #tpu.memory_space<vmem>>, vector<1x4xf32>
    tpu.vector_store %arg3[%c0_15, %c0_16], %50 {strides = array<i32>} : memref<1x4xf32, #tpu.memory_space<vmem>>, vector<1x4xf32>,
    return
  }
  func.func @transform_0(%arg0: i32) -> (i32, i32, i32) {
    %c0_i32 = arith.constant 0 : i32
    %c0_i32_0 = arith.constant 0 : i32
    %c0_i32_1 = arith.constant 0 : i32
    return %c0_i32, %c0_i32_0, %arg0 : i32, i32, i32
  }
  func.func @transform_1(%arg0: i32) -> (i32, i32) {
    %c0_i32 = arith.constant 0 : i32
    %c0_i32_0 = arith.constant 0 : i32
    return %c0_i32, %arg0 : i32, i32
  }
  func.func @transform_2(%arg0: i32) -> (i32, i32) {
    %c0_i32 = arith.constant 0 : i32
    %c0_i32_0 = arith.constant 0 : i32
    return %c0_i32, %arg0 : i32, i32
  }
}

</mosaic_0001>

<llo_original>
// kernel: tpu_custom_call.1
$region0: #{tpu_custom_call.1}
  #allocation0 [shape = 'u32[]', space=smem, size = 0x4, offset = 0x4, fixed_abs, tag = 'smem constant byte address 0x4 - core index']
  #allocation1 [shape = 'u32[72,128]{1,0:T(1,128)}', space=vmem, size = 0x9000, scoped, tag = 'internal scratch']
  %s0 = inlined_call_operand.vmem [shape: f32[2,8,4], index: 0, kind: input, shape index: {}]
  %s1 = inlined_call_operand.vmem [shape: f32[8,4], index: 1, kind: input, shape index: {}]
  %s2 = inlined_call_operand.hbm [shape: f32[1,4], index: 2, kind: output, shape index: {}]
  %s3 = sld [smem:[#allocation0]]
  $region18: #{tpu_custom_call.1} parent=0
    _
  %s5 = ssub.s32 1, %s3
  %s6 = scalar_select 0, %s5, %s3
  $region1: #{tpu_custom_call.1} parent=0
    #allocation2 [shape = 'u8[512]{0}', space=vmem, size = 0x400, scoped, tag = 'output window, operand 0, single buffered']
    #allocation3 [shape = 's32[1]{0}', space=sflag, size = 0x4, scoped, tag = 'scoped memory for tpu_custom_call.1']
    %7 = vsyncpa [#allocation3], 0
    // Predicated region
    $region2: #{tpu_custom_call.1} parent=1 // pred_check
      _
    $region3: #{tpu_custom_call.1} parent=1 // pred_check_branch
      %9 = sbr.rel (0) target = $region5
    $region4: #{tpu_custom_call.1} parent=1 // pred_region
      _
    $region5: #{tpu_custom_call.1} parent=1 // pred_fallthru
      _
    // Predicated region
    $region6: #{tpu_custom_call.1} parent=1 // pred_check
      _
    $region7: #{tpu_custom_call.1} parent=1 // pred_check_branch
      %11 = sbr.rel (0) target = $region9
    $region8: #{tpu_custom_call.1} parent=1 // pred_region
      _
    $region9: #{tpu_custom_call.1} parent=1 // pred_fallthru
      _
    %v12 = vld [vmem:[%s0] sm:$0xff]
    %v13 = vld [vmem:[%s1] sm:$0xff]
    %s14 = scalar_lea.vmem %s0, 8
    %v15 = vld [vmem:[%s14] sm:$0xff]
    %vm16 = vcmask 31744
    %v17 = vsel %vm16, %v13, -inf
    %v18 = vrot.slane %v17, 4
    %v19 = vmax.f32 %v17, %v18
    %v20 = vrot.slane %v19, 2
    %v21 = vmax.f32 %v19, %v20
    %v22 = vrot.slane %v21, 1
    %v23 = vmax.f32 %v21, %v22
    %v24 = vsub.f32 %v13, %v23
    %v25 = vmul.f32 %v24, 1.442695
    %v26 = vpow.pop %v25
    %v27 = vsel %vm16, %v26, 0.0
    %v28 = vrot.slane %v27, 4
    %v29 = vadd.f32 %v27, %v28
    %v30 = vrot.slane %v29, 2
    %v31 = vadd.f32 %v29, %v30
    %v32 = vrot.slane %v31, 1
    %v33 = vadd.f32 %v31, %v32
    %v34 = vlog2.pop %v33
    %v35 = vmul.f32 %v34, 0.6931472
    %v36 = vadd.f32 %v35, %v23
    %v37 = vsub.f32 %v13, %v36
    %v38 = vsub.f32 %v12, %v13
    %v39 = vand.u32 2147483647, %v38
    %v40 = vsub.f32 %v39, %v37
    %v41 = vsel %vm16, %v12, -inf
    %v42 = vrot.slane %v41, 4
    %v43 = vmax.f32 %v41, %v42
    %v44 = vrot.slane %v43, 2
    %v45 = vmax.f32 %v43, %v44
    %v46 = vrot.slane %v45, 1
    %v47 = vmax.f32 %v45, %v46
    %v48 = vsub.f32 %v12, %v47
    %v49 = vmul.f32 %v48, 1.442695
    %v50 = vpow.pop %v49
    %v51 = vsel %vm16, %v50, 0.0
    %v52 = vrot.slane %v51, 4
    %v53 = vadd.f32 %v51, %v52
    %v54 = vrot.slane %v53, 2
    %v55 = vadd.f32 %v53, %v54
    %v56 = vrot.slane %v55, 1
    %v57 = vadd.f32 %v55, %v56
    %v58 = vlog2.pop %v57
    %v59 = vmul.f32 %v58, 0.6931472
    %v60 = vadd.f32 %v59, %v47
    %v61 = vsub.f32 %v12, %v60
    %v62 = vsub.f32 %v37, %v61
    %v63 = vrcp.pop %v15
    %v64 = vmul.f32 %v15, %v63
    %v65 = vsub.f32 2.0, %v64
    %v66 = vmul.f32 %v63, %v65
    %v67 = vmul.f32 %v62, 0.5
    %v68 = vmul.f32 %v67, %v62
    %v69 = vmul.f32 %v68, %v66
    %v70 = vlog2.pop %v15
    %v71 = vmul.f32 %v70, 0.6931472
    %v72 = vmul.f32 %v71, 0.5
    %v73 = vadd.f32 %v69, %v72
    %v74 = vadd.f32 %v73, 0.9189385
    %v75 = vadd.f32 %v40, %v74
    %v76 = vsel %vm16, %v75, 0.0
    %v77 = vrot.slane %v76, 4
    %v78 = vadd.f32 %v76, %v77
    %v79 = vrot.slane %v78, 2
    %v80 = vadd.f32 %v78, %v79
    %v81 = vrot.slane %v80, 1
    %v82 = vadd.f32 %v80, %v81
    %v83 = vmul.f32 %v82, 0.125
    %vm84 = vcmask 24576
    %85 = vst.msk [vmem:[#allocation2] sm:$0x1] %vm84, %v83
    // Predicated region
    $region10: #{tpu_custom_call.1} parent=1 // pred_check
      _
    $region11: #{tpu_custom_call.1} parent=1 // pred_check_branch
      %87 = sbr.rel (0) target = $region13
    $region12: #{tpu_custom_call.1} parent=1 // pred_region
      %89 = vsyncadd [#allocation3], 0
      %s91 = sshll.u32 [#allocation2], 4
      %s92 = int_to_ptr.vmem [resolvable:$true] %s91
      %s93 = sshll.u32 %s2, 4
      %s94 = int_to_ptr.hbm [resolvable:$true] %s93
      %96 = dma.vmem_to_hbm [thread:$0]  %s92, 16, %s94, [#allocation3]
    $region13: #{tpu_custom_call.1} parent=1 // pred_fallthru
      _
    // Predicated region
    $region14: #{tpu_custom_call.1} parent=1 // pred_check
      _
    $region15: #{tpu_custom_call.1} parent=1 // pred_check_branch
      %98 = sbr.rel (0) target = $region17
    $region16: #{tpu_custom_call.1} parent=1 // pred_region
      %100 = dma.done [#allocation3], 16
    $region17: #{tpu_custom_call.1} parent=1 // pred_fallthru
      _
    %101 = vsyncpa [#allocation3], 1

</llo_original>
